<compile_context>
chip_gen: v7x
topology: tpu7x:2x2x1
jax: 0.10.0
libtpu: 0.0.40
codegen_flags: <defaults>
</compile_context>

<pallas_src>
import jax
import jax.numpy as jnp
from jax import lax
from jax.experimental import pallas as pl
from jax.experimental.pallas import tpu as pltpu


def _global_atten_kernel(patches_ref, w1a_ref, w2_ref, b2_ref, o_ref):
    # patches_ref: (KKCP, LT)   bf16 im2col patches (ones row + zero pad rows)
    # w1a_ref:     (Cout, KKCP) bf16 BN-folded conv1 weight, col KKC = folded bias
    # w2_ref:      (Cout, 1)    f32  conv2 (1x1) weight column
    # b2_ref:      (1,) SMEM    f32  conv2 bias scalar
    # o_ref:       (1, LT)      f32  lane-dense output row
    y = jnp.dot(w1a_ref[...], patches_ref[...],
                preferred_element_type=jnp.float32)          # MXU, f32 accumulate
    y = jnp.maximum(y, 0.0)                                   # ReLU (VPU)
    out = jnp.sum(y * w2_ref[...], axis=0, keepdims=True)     # 1x1 conv (VPU+XLU)
    o_ref[...] = out + b2_ref[0]                              # unmasked lane store


def _pick_lane_tile(total, cap=4096):
    """Largest multiple of 128 dividing `total`, <= cap, leaving >= 2 grid steps
    (keeps both v7x TensorCores busy); falls back to the full span."""
    best = None
    t = 128
    while t <= min(cap, total):
        if total % t == 0 and total // t >= 2:
            best = t
        t += 128
    return best if best is not None else total


def global_atten_forward(x_nchw, params):
    """x_nchw: (N, Cin, H, W) float32 -> (N, 1, H, W) float32."""
    w1, b1 = params["w1"], params["b1"]
    gamma, beta = params["gamma"], params["beta"]
    run_mean, run_var = params["running_mean"], params["running_var"]
    w2, b2 = params["w2"], params["b2"]

    N, Cin, H, W = x_nchw.shape
    K = w1.shape[0]
    Cout = w1.shape[-1]
    pad = (K - 1) // 2
    eps = 1e-5
    HW = H * W
    total = N * HW
    KKC = K * K * Cin
    KKCP = ((KKC + 1 + 127) // 128) * 128      # pad contraction dim (246 -> 256)

    # --- Fold eval-mode BN into conv1: y = x*(w1*scale) + (b1*scale + shift) ---
    scale = gamma / jnp.sqrt(run_var + eps)                    # (Cout,)
    shift = beta - run_mean * scale                            # (Cout,)
    w1_f = w1 * scale                                          # (K,K,Cin,Cout)
    b1_f = b1 * scale + shift                                  # (Cout,)

    # Augmented, padded conv1 weight: (Cout, KKCP); col KKC = folded bias, rest 0.
    w1_t = w1_f.reshape(KKC, Cout).T                           # (Cout, KKC)
    w1_aug = jnp.zeros((Cout, KKCP), jnp.float32)
    w1_aug = w1_aug.at[:, :KKC].set(w1_t).at[:, KKC].set(b1_f)
    w1_aug = w1_aug.astype(jnp.bfloat16)

    # --- im2col directly in (KKC, N*HW) layout (no big-array transposes) -------
    # Only the small raw input is transposed; taps land in final layout.
    x_b = x_nchw.astype(jnp.bfloat16)
    x_t = jnp.transpose(x_b, (1, 0, 2, 3))                     # (Cin, N, H, W)
    xp = jnp.pad(x_t, ((0, 0), (0, 0), (pad, pad), (pad, pad)))
    cols = [xp[:, :, kh:kh + H, kw:kw + W].reshape(Cin, total)
            for kh in range(K) for kw in range(K)]             # each (Cin, N*HW)
    patches = jnp.concatenate(cols, axis=0)                    # (KKC, N*HW)
    ones_row = jnp.ones((1, total), jnp.bfloat16)              # folds conv1 bias
    pad_rows = jnp.zeros((KKCP - KKC - 1, total), jnp.bfloat16)
    patches_aug = jnp.concatenate([patches, ones_row, pad_rows], axis=0)  # (KKCP, total)

    # --- one wide matmul, gridded over lane chunks -----------------------------
    lane_tile = _pick_lane_tile(total)
    grid = (total // lane_tile,)

    out = pl.pallas_call(
        _global_atten_kernel,
        out_shape=jax.ShapeDtypeStruct((1, total), jnp.float32),
        grid_spec=pltpu.PrefetchScalarGridSpec(
            num_scalar_prefetch=0,
            grid=grid,
            in_specs=[
                pl.BlockSpec((KKCP, lane_tile), lambda i: (0, i)),
                pl.BlockSpec((Cout, KKCP), lambda i: (0, 0)),
                pl.BlockSpec((Cout, 1), lambda i: (0, 0)),
                pl.BlockSpec(memory_space=pltpu.MemorySpace.SMEM),
            ],
            out_specs=pl.BlockSpec((1, lane_tile), lambda i: (0, i)),
        ),
        compiler_params=pltpu.CompilerParams(
            dimension_semantics=("parallel",)),
    )(patches_aug, w1_aug, w2, b2.reshape(1))

    return out.reshape(N, H, W)[:, None, :, :]                 # NCHW (N,1,H,W)


def make_params(key, in_dim, out_dim, kernel_size):
    """Deterministic init matching the module's __init__ (kaiming fan_out, relu)."""
    k1, k2, k3, k4 = jax.random.split(key, 4)
    std1 = (2.0 / (out_dim * kernel_size * kernel_size)) ** 0.5
    w1 = jax.random.normal(k1, (kernel_size, kernel_size, in_dim, out_dim),
                           jnp.float32) * std1
    bound1 = 1.0 / (in_dim * kernel_size * kernel_size) ** 0.5
    b1 = jax.random.uniform(k2, (out_dim,), jnp.float32, -bound1, bound1)
    std2 = (2.0 / 1.0) ** 0.5
    w2 = jax.random.normal(k3, (out_dim, 1), jnp.float32) * std2
    bound2 = 1.0 / (out_dim * 1 * 1) ** 0.5
    b2 = jax.random.uniform(k4, (1,), jnp.float32, -bound2, bound2)
    return dict(
        w1=w1, b1=b1,
        gamma=jnp.ones((out_dim,), jnp.float32),
        beta=jnp.zeros((out_dim,), jnp.float32),
        running_mean=jnp.zeros((out_dim,), jnp.float32),
        running_var=jnp.ones((out_dim,), jnp.float32),
        w2=w2, b2=b2,
    )


def _reference(x_nchw, params):
    """Pure-JAX f32 reference (lax.conv) for correctness check."""
    eps = 1e-5
    x = jnp.transpose(x_nchw, (0, 2, 3, 1))  # NHWC
    y = lax.conv_general_dilated(
        x, params["w1"], window_strides=(1, 1), padding="SAME",
        dimension_numbers=("NHWC", "HWIO", "NHWC")) + params["b1"]
    scale = params["gamma"] / jnp.sqrt(params["running_var"] + eps)
    shift = params["beta"] - params["running_mean"] * scale
    y = jnp.maximum(y * scale + shift, 0.0)
    y = jnp.einsum("nhwc,co->nhwo", y, params["w2"]) + params["b2"]
    return jnp.transpose(y, (0, 3, 1, 2))


if __name__ == "__main__":
    # Small shapes: in_dim = SEMANTIC_EMBEDDING_DIM + 1 = 5, out_dim = 8.
    N, Cin, Cout, H, W, K = 2, 5, 8, 16, 16, 7

    key = jax.random.PRNGKey(0)
    kx, kp = jax.random.split(key)
    x = jax.random.normal(kx, (N, Cin, H, W), jnp.float32)
    params = make_params(kp, Cin, Cout, K)

    out = jax.jit(global_atten_forward)(x, params)
    out = jax.block_until_ready(out)

    ref = jax.block_until_ready(_reference(x, params))
    assert out.shape == (N, 1, H, W), out.shape
    # bf16 inputs to a 246-term contraction -> looser tolerance vs f32 reference.
    assert jnp.allclose(out, ref, rtol=5e-2, atol=1e-1), float(
        jnp.max(jnp.abs(out - ref)))

    print("KERNEL_OK")
</pallas_src>

<mosaic_0001>
module attributes {stable_mosaic.version = 11 : i64} {
  func.func @_global_atten_kernel(%arg0: i32, %arg1: memref<256x256xbf16, #tpu.memory_space<vmem>>, %arg2: memref<8x256xbf16, #tpu.memory_space<vmem>>, %arg3: memref<8x1xf32, #tpu.memory_space<vmem>>, %arg4: memref<1xf32, #tpu.memory_space<smem>>, %arg5: memref<1x256xf32, #tpu.memory_space<vmem>>) attributes {dimension_semantics = [#tpu.dimension_semantics<parallel>], iteration_bounds = array<i64: 2>, scalar_prefetch = 0 : i64, scratch_operands = 0 : i64, tpu.core_type = #tpu.core_type<tc>, window_params = [{transform_indices = @transform_0, window_bounds = array<i64: 256, 256>}, {pipeline_mode = #tpu.pipeline_mode<synchronous>, transform_indices = @transform_1, window_bounds = array<i64: 8, 256>}, {pipeline_mode = #tpu.pipeline_mode<synchronous>, transform_indices = @transform_2, window_bounds = array<i64: 8, 1>}, {transform_indices = @transform_3, window_bounds = array<i64: 1>}, {transform_indices = @transform_4, window_bounds = array<i64: 1, 256>}]} {
    %c0 = arith.constant 0 : index
    %c0_0 = arith.constant 0 : index
    %0 = vector.load %arg2[%c0, %c0_0] : memref<8x256xbf16, #tpu.memory_space<vmem>>, vector<8x256xbf16>
    %c0_1 = arith.constant 0 : index
    %c0_2 = arith.constant 0 : index
    %1 = vector.load %arg1[%c0_1, %c0_2] : memref<256x256xbf16, #tpu.memory_space<vmem>>, vector<256x256xbf16>
    %cst = arith.constant dense<0.000000e+00> : vector<8x256xf32>
    %2 = tpu.matmul %0, %1, %cst {dimension_numbers = #tpu.dot_dimension_numbers<[1], [0], [0], [1], [0, 0, 1, 1], [], []>} : vector<8x256xbf16>, vector<256x256xbf16>, vector<8x256xf32> -> vector<8x256xf32>
    %cst_3 = arith.constant 0.000000e+00 : f32
    %3 = vector.broadcast %cst_3 : f32 to vector<8x256xf32>
    %4 = arith.maximumf %2, %3 : vector<8x256xf32>
    %c0_4 = arith.constant 0 : index
    %c0_5 = arith.constant 0 : index
    %5 = vector.load %arg3[%c0_4, %c0_5] : memref<8x1xf32, #tpu.memory_space<vmem>>, vector<8x1xf32>
    %6 = vector.broadcast %5 : vector<8x1xf32> to vector<8x256xf32>
    %7 = arith.mulf %4, %6 : vector<8x256xf32>
    %cst_6 = arith.constant dense<0.000000e+00> : vector<256xf32>
    %8 = vector.multi_reduction <add>, %7, %cst_6 [0] : vector<8x256xf32> to vector<256xf32>
    %9 = vector.shape_cast %8 : vector<256xf32> to vector<1x256xf32>
    %c0_7 = arith.constant 0 : index
    %10 = memref.load %arg4[%c0_7] : memref<1xf32, #tpu.memory_space<smem>>
    %11 = vector.broadcast %10 : f32 to vector<1x256xf32>
    %12 = arith.addf %9, %11 : vector<1x256xf32>
    %c0_8 = arith.constant 0 : index
    %c0_9 = arith.constant 0 : index
    %13 = vector.load %arg5[%c0_8, %c0_9] : memref<1x256xf32, #tpu.memory_space<vmem>>, vector<1x256xf32>
    tpu.vector_store %arg5[%c0_8, %c0_9], %12 {strides = array<i32>} : memref<1x256xf32, #tpu.memory_space<vmem>>, vector<1x256xf32>,
    return
  }
  func.func @transform_0(%arg0: i32) -> (i32, i32) {
    %c0_i32 = arith.constant 0 : i32
    %c0_i32_0 = arith.constant 0 : i32
    return %c0_i32, %arg0 : i32, i32
  }
  func.func @transform_1(%arg0: i32) -> (i32, i32) {
    %c0_i32 = arith.constant 0 : i32
    %c0_i32_0 = arith.constant 0 : i32
    %c0_i32_1 = arith.constant 0 : i32
    return %c0_i32, %c0_i32_0 : i32, i32
  }
  func.func @transform_2(%arg0: i32) -> (i32, i32) {
    %c0_i32 = arith.constant 0 : i32
    %c0_i32_0 = arith.constant 0 : i32
    %c0_i32_1 = arith.constant 0 : i32
    return %c0_i32, %c0_i32_0 : i32, i32
  }
  func.func @transform_3(%arg0: i32) -> i32 {
    %c0_i32 = arith.constant 0 : i32
    %c0_i32_0 = arith.constant 0 : i32
    return %c0_i32 : i32
  }
  func.func @transform_4(%arg0: i32) -> (i32, i32) {
    %c0_i32 = arith.constant 0 : i32
    %c0_i32_0 = arith.constant 0 : i32
    return %c0_i32, %arg0 : i32, i32
  }
}

</mosaic_0001>

<llo_original>
// kernel: global_atten_forward.1
$region0: #{global_atten_forward.1}
  #allocation0 [shape = 'u32[]', space=smem, size = 0x4, offset = 0x4, fixed_abs, tag = 'smem constant byte address 0x4 - core index']
  #allocation1 [shape = 'u32[144,128]{1,0:T(1,128)}', space=vmem, size = 0x12000, scoped, tag = 'internal scratch']
  #allocation2 [shape = 'f32[1]{0:T(128)S(6)}', space=smem, size = 0x200, scoped, tag = 'scoped memory for global_atten_forward.1']
  %s0 = inlined_call_operand.vmem [shape: bf16[256,512], index: 0, kind: input, shape index: {}]
  %s1 = inlined_call_operand.vmem [shape: bf16[8,256], index: 1, kind: input, shape index: {}]
  %s2 = inlined_call_operand.vmem [shape: f32[8,1], index: 2, kind: input, shape index: {}]
  %s3 = inlined_call_operand.<no memory space> [shape: f32[1], index: 3, kind: input, shape index: {}]
  %s4 = inlined_call_operand.vmem [shape: f32[1,512], index: 4, kind: output, shape index: {}]
  %s5 = sld [smem:[#allocation0]]
  $region87: #{global_atten_forward.1} parent=0
    _
  %s7 = ssub.s32 1, %s5
  %s8 = scalar_select 0, %s7, %s5
  %9 = sst [smem:[#allocation2]] %s3
  $region1: #{global_atten_forward.1} parent=0
    #allocation3 [shape = 'u8[262144]{0}', space=vmem, size = 0x40000, scoped, tag = 'input window, operand 0']
    loop: start=0, step=1, limit=4
    $region2: #{global_atten_forward.1} parent=1 // loop_pre_header
      _
    $region3: #{global_atten_forward.1} parent=1 // loop_header
      %s11 = sphi 0, %s15
      %p12 = scmp.ge.s32.totalorder %s11, 4
      %s21 = sphi 0, %s23
      %s24 = sphi 0, %s21
      %s25 = sphi 0, %s24
      %s41 = sphi 0, %s25
      %s45 = sphi 0, %s45
      %s47 = sphi 0, %s45
      %s48 = sphi 0, %s47
      %s62 = sphi 0, %s48
      %s66 = sphi 0, %s66
      %s68 = sphi 0, %s66
      %s69 = sphi 0, %s68
      %s83 = sphi 0, %s69
      %s87 = sphi 0, %s87
      %s89 = sphi 0, %s87
      %s90 = sphi 0, %s89
      %s104 = sphi 0, %s90
      %s110 = sphi 0, %s112
      %s113 = sphi 0, %s110
      %s114 = sphi 0, %s113
      %s130 = sphi 0, %s114
    $region4: #{global_atten_forward.1} parent=1 // loop_header_branch
      %14 = sbr.rel (%p12) target = $region8
    $region5: #{global_atten_forward.1} parent=1 // loop_body
      %s16 = ssub.s32 %s11, 1
      %s17 = ssub.s32 %s11, 2
      %s18 = sadd.s32 %s11, 1
      %s19 = ssub.s32 %s11, %s18
      %p20 = scmp.eq.s32.totalorder %s19, 0
      %s22 = sadd.s32 %s21, 1
      %s23 = scalar_select %p20, %s21, %s22
      %p26 = pneg %p20
      %p27 = scmp.eq.s32.totalorder %s11, 1
      %p28 = por %p26, %p27
      %p29 = scmp.ne.s32.totalorder %s21, %s24
      %p30 = scmp.eq.s32.totalorder %s11, 0
      %p31 = por %p29, %p30
      %p32 = scmp.ne.s32.totalorder %s21, %s24
      %p33 = scmp.eq.s32.totalorder %s16, 1
      %p34 = por %p32, %p33
      %p35 = scmp.ne.s32.totalorder %s24, %s25
      %p36 = scmp.eq.s32.totalorder %s16, 0
      %p37 = por %p35, %p36
      %p38 = scmp.ne.s32.totalorder %s24, %s25
      %p39 = scmp.eq.s32.totalorder %s17, 1
      %p40 = por %p38, %p39
      %p42 = scmp.ne.s32.totalorder %s25, %s41
      %p43 = scmp.eq.s32.totalorder %s17, 0
      %p44 = por %p42, %p43
      %s46 = sadd.s32 %s45, 1
      %p49 = scmp.eq.s32.totalorder %s11, 1
      %p50 = scmp.ne.s32.totalorder %s45, %s47
      %p51 = scmp.eq.s32.totalorder %s11, 0
      %p52 = por %p50, %p51
      %p53 = scmp.ne.s32.totalorder %s45, %s47
      %p54 = scmp.eq.s32.totalorder %s16, 1
      %p55 = por %p53, %p54
      %p56 = scmp.ne.s32.totalorder %s47, %s48
      %p57 = scmp.eq.s32.totalorder %s16, 0
      %p58 = por %p56, %p57
      %p59 = scmp.ne.s32.totalorder %s47, %s48
      %p60 = scmp.eq.s32.totalorder %s17, 1
      %p61 = por %p59, %p60
      %p63 = scmp.ne.s32.totalorder %s48, %s62
      %p64 = scmp.eq.s32.totalorder %s17, 0
      %p65 = por %p63, %p64
      %s67 = sadd.s32 %s66, 1
      %p70 = scmp.eq.s32.totalorder %s11, 1
      %p71 = scmp.ne.s32.totalorder %s66, %s68
      %p72 = scmp.eq.s32.totalorder %s11, 0
      %p73 = por %p71, %p72
      %p74 = scmp.ne.s32.totalorder %s66, %s68
      %p75 = scmp.eq.s32.totalorder %s16, 1
      %p76 = por %p74, %p75
      %p77 = scmp.ne.s32.totalorder %s68, %s69
      %p78 = scmp.eq.s32.totalorder %s16, 0
      %p79 = por %p77, %p78
      %p80 = scmp.ne.s32.totalorder %s68, %s69
      %p81 = scmp.eq.s32.totalorder %s17, 1
      %p82 = por %p80, %p81
      %p84 = scmp.ne.s32.totalorder %s69, %s83
      %p85 = scmp.eq.s32.totalorder %s17, 0
      %p86 = por %p84, %p85
      %s88 = sadd.s32 %s87, 1
      %p91 = scmp.eq.s32.totalorder %s11, 1
      %p92 = scmp.ne.s32.totalorder %s87, %s89
      %p93 = scmp.eq.s32.totalorder %s11, 0
      %p94 = por %p92, %p93
      %p95 = scmp.ne.s32.totalorder %s87, %s89
      %p96 = scmp.eq.s32.totalorder %s16, 1
      %p97 = por %p95, %p96
      %p98 = scmp.ne.s32.totalorder %s89, %s90
      %p99 = scmp.eq.s32.totalorder %s16, 0
      %p100 = por %p98, %p99
      %p101 = scmp.ne.s32.totalorder %s89, %s90
      %p102 = scmp.eq.s32.totalorder %s17, 1
      %p103 = por %p101, %p102
      %p105 = scmp.ne.s32.totalorder %s90, %s104
      %p106 = scmp.eq.s32.totalorder %s17, 0
      %p107 = por %p105, %p106
      %s108 = ssub.s32 %s11, %s18
      %p109 = scmp.eq.s32.totalorder %s108, 0
      %s111 = sadd.s32 %s110, 1
      %s112 = scalar_select %p109, %s110, %s111
      %p115 = pneg %p109
      %p116 = scmp.eq.s32.totalorder %s11, 1
      %p117 = por %p115, %p116
      %p118 = scmp.ne.s32.totalorder %s110, %s113
      %p119 = scmp.eq.s32.totalorder %s11, 0
      %p120 = por %p118, %p119
      %p121 = scmp.ne.s32.totalorder %s110, %s113
      %p122 = scmp.eq.s32.totalorder %s16, 1
      %p123 = por %p121, %p122
      %p124 = scmp.ne.s32.totalorder %s113, %s114
      %p125 = scmp.eq.s32.totalorder %s16, 0
      %p126 = por %p124, %p125
      %p127 = scmp.ne.s32.totalorder %s113, %s114
      %p128 = scmp.eq.s32.totalorder %s17, 1
      %p129 = por %p127, %p128
      %p131 = scmp.ne.s32.totalorder %s114, %s130
      %p132 = scmp.eq.s32.totalorder %s17, 0
      %p133 = por %p131, %p132
      %p134 = scmp.le.s32.totalorder 1, %s11
      %p135 = scmp.lt.s32.totalorder %s11, 3
      %p136 = pnand %p134, %p135
      %p137 = pneg %p136
      // Predicated region
      $region9: #{global_atten_forward.1} parent=5 // pred_check
        _
      $region10: #{global_atten_forward.1} parent=5 // pred_check_branch
        %139 = sbr.rel (%p136) target = $region12
      $region11: #{global_atten_forward.1} parent=5 // pred_region
        %s140 = ssub.s32 %s11, 1
        // Predicated region
        $region13: #{global_atten_forward.1} parent=11 // pred_check
          %p141 = pneg %p58
        $region14: #{global_atten_forward.1} parent=11 // pred_check_branch
          %143 = sbr.rel (%p141) target = $region16
        $region15: #{global_atten_forward.1} parent=11 // pred_region
          _
        $region16: #{global_atten_forward.1} parent=11 // pred_fallthru
          _
        // Predicated region
        $region17: #{global_atten_forward.1} parent=11 // pred_check
          %p144 = pneg %p79
        $region18: #{global_atten_forward.1} parent=11 // pred_check_branch
          %146 = sbr.rel (%p144) target = $region20
        $region19: #{global_atten_forward.1} parent=11 // pred_region
          _
        $region20: #{global_atten_forward.1} parent=11 // pred_fallthru
          _
        // Predicated region
        $region21: #{global_atten_forward.1} parent=11 // pred_check
          %p147 = pneg %p100
        $region22: #{global_atten_forward.1} parent=11 // pred_check_branch
          %149 = sbr.rel (%p147) target = $region24
        $region23: #{global_atten_forward.1} parent=11 // pred_region
          _
        $region24: #{global_atten_forward.1} parent=11 // pred_fallthru
          _
      $region12: #{global_atten_forward.1} parent=5 // pred_fallthru
        _
      %p150 = scmp.lt.s32.totalorder %s11, 2
      // Predicated region
      $region25: #{global_atten_forward.1} parent=5 // pred_check
        %p151 = pneg %p150
      $region26: #{global_atten_forward.1} parent=5 // pred_check_branch
        %153 = sbr.rel (%p151) target = $region28
      $region27: #{global_atten_forward.1} parent=5 // pred_region
        // Predicated region
        $region29: #{global_atten_forward.1} parent=27 // pred_check
          %p154 = pneg %p31
        $region30: #{global_atten_forward.1} parent=27 // pred_check_branch
          %156 = sbr.rel (%p154) target = $region32
        $region31: #{global_atten_forward.1} parent=27 // pred_region
          %s157 = sand.u32 %s21, 1
          %s158 = sand.u32 %s21, 1
          %s159 = smul.addr %s158, 256
          %s160 = scalar_lea.vmem [#allocation3], %s159
          %s161 = smul.u32 2, %s11
          %s162 = smul.addr %s161, 4
          %s163 = scalar_lea.vmem %s0, %s162
          // Predicated region
          $region33: #{global_atten_forward.1} parent=31 // pred_check
            _
          $region34: #{global_atten_forward.1} parent=31 // pred_check_branch
            %165 = sbr.rel (0) target = $region36
          $region35: #{global_atten_forward.1} parent=31 // pred_region
            // Predicated region
            $region37: #{global_atten_forward.1} parent=35 // pred_check
              _
            $region38: #{global_atten_forward.1} parent=35 // pred_check_branch
              %167 = sbr.rel (0) target = $region40
            $region39: #{global_atten_forward.1} parent=35 // pred_region
              // Predicated region
              $region52: #{global_atten_forward.1} parent=39 // pred_check
                _
              $region53: #{global_atten_forward.1} parent=39 // pred_check_branch
                %244 = sbr.rel (0) target = $region55
              $region54: #{global_atten_forward.1} parent=39 // pred_region
                loop: start=0, step=1, limit=1
                $region56: #{global_atten_forward.1} parent=54 // loop_pre_header
                  _
                $region57: #{global_atten_forward.1} parent=54 // loop_header
                  %s246 = sphi 0, %s250
                  %p247 = scmp.ge.s32.totalorder %s246, 1
                  %s251 = sphi %s163, %s163
                  %s252 = sphi %s160, %s160
                $region58: #{global_atten_forward.1} parent=54 // loop_header_branch
                  %249 = sbr.rel (%p247) target = $region62
                $region59: #{global_atten_forward.1} parent=54 // loop_body
                  %v253 = vld [vmem:[%s251] sm:$0xff]
                  %254 = vst [vmem:[%s252] sm:$0xff] %v253
                  %v255 = vld [vmem:[%s251 + $0x10] sm:$0xff]
                  %256 = vst [vmem:[%s252 + $0x8] sm:$0xff] %v255
                  %v257 = vld [vmem:[%s251 + $0x20] sm:$0xff]
                  %258 = vst [vmem:[%s252 + $0x10] sm:$0xff] %v257
                  %v259 = vld [vmem:[%s251 + $0x30] sm:$0xff]
                  %260 = vst [vmem:[%s252 + $0x18] sm:$0xff] %v259
                  %v261 = vld [vmem:[%s251 + $0x40] sm:$0xff]
                  %262 = vst [vmem:[%s252 + $0x20] sm:$0xff] %v261
                  %v263 = vld [vmem:[%s251 + $0x50] sm:$0xff]
                  %264 = vst [vmem:[%s252 + $0x28] sm:$0xff] %v263
                  %v265 = vld [vmem:[%s251 + $0x60] sm:$0xff]
                  %266 = vst [vmem:[%s252 + $0x30] sm:$0xff] %v265
                  %v267 = vld [vmem:[%s251 + $0x70] sm:$0xff]
                  %268 = vst [vmem:[%s252 + $0x38] sm:$0xff] %v267
                  %v269 = vld [vmem:[%s251 + $0x80] sm:$0xff]
                  %270 = vst [vmem:[%s252 + $0x40] sm:$0xff] %v269
                  %v271 = vld [vmem:[%s251 + $0x90] sm:$0xff]
                  %272 = vst [vmem:[%s252 + $0x48] sm:$0xff] %v271
                  %v273 = vld [vmem:[%s251 + $0xa0] sm:$0xff]
                  %274 = vst [vmem:[%s252 + $0x50] sm:$0xff] %v273
                  %v275 = vld [vmem:[%s251 + $0xb0] sm:$0xff]
                  %276 = vst [vmem:[%s252 + $0x58] sm:$0xff] %v275
                  %v277 = vld [vmem:[%s251 + $0xc0] sm:$0xff]
                  %278 = vst [vmem:[%s252 + $0x60] sm:$0xff] %v277
                  %v279 = vld [vmem:[%s251 + $0xd0] sm:$0xff]
                  %280 = vst [vmem:[%s252 + $0x68] sm:$0xff] %v279
                  %v281 = vld [vmem:[%s251 + $0xe0] sm:$0xff]
                  %282 = vst [vmem:[%s252 + $0x70] sm:$0xff] %v281
                  %v283 = vld [vmem:[%s251 + $0xf0] sm:$0xff]
                  %284 = vst [vmem:[%s252 + $0x78] sm:$0xff] %v283
                  %v285 = vld [vmem:[%s251 + $0x100] sm:$0xff]
                  %286 = vst [vmem:[%s252 + $0x80] sm:$0xff] %v285
                  %v287 = vld [vmem:[%s251 + $0x110] sm:$0xff]
                  %288 = vst [vmem:[%s252 + $0x88] sm:$0xff] %v287
                  %v289 = vld [vmem:[%s251 + $0x120] sm:$0xff]
                  %290 = vst [vmem:[%s252 + $0x90] sm:$0xff] %v289
                  %v291 = vld [vmem:[%s251 + $0x130] sm:$0xff]
                  %292 = vst [vmem:[%s252 + $0x98] sm:$0xff] %v291
                  %v293 = vld [vmem:[%s251 + $0x140] sm:$0xff]
                  %294 = vst [vmem:[%s252 + $0xa0] sm:$0xff] %v293
                  %v295 = vld [vmem:[%s251 + $0x150] sm:$0xff]
                  %296 = vst [vmem:[%s252 + $0xa8] sm:$0xff] %v295
                  %v297 = vld [vmem:[%s251 + $0x160] sm:$0xff]
                  %298 = vst [vmem:[%s252 + $0xb0] sm:$0xff] %v297
                  %v299 = vld [vmem:[%s251 + $0x170] sm:$0xff]
                  %300 = vst [vmem:[%s252 + $0xb8] sm:$0xff] %v299
                  %v301 = vld [vmem:[%s251 + $0x180] sm:$0xff]
                  %302 = vst [vmem:[%s252 + $0xc0] sm:$0xff] %v301
                  %v303 = vld [vmem:[%s251 + $0x190] sm:$0xff]
                  %304 = vst [vmem:[%s252 + $0xc8] sm:$0xff] %v303
                  %v305 = vld [vmem:[%s251 + $0x1a0] sm:$0xff]
                  %306 = vst [vmem:[%s252 + $0xd0] sm:$0xff] %v305
                  %v307 = vld [vmem:[%s251 + $0x1b0] sm:$0xff]
                  %308 = vst [vmem:[%s252 + $0xd8] sm:$0xff] %v307
                  %v309 = vld [vmem:[%s251 + $0x1c0] sm:$0xff]
                  %310 = vst [vmem:[%s252 + $0xe0] sm:$0xff] %v309
                  %v311 = vld [vmem:[%s251 + $0x1d0] sm:$0xff]
                  %312 = vst [vmem:[%s252 + $0xe8] sm:$0xff] %v311
                  %v313 = vld [vmem:[%s251 + $0x1e0] sm:$0xff]
                  %314 = vst [vmem:[%s252 + $0xf0] sm:$0xff] %v313
                  %v315 = vld [vmem:[%s251 + $0x1f0] sm:$0xff]
                  %316 = vst [vmem:[%s252 + $0xf8] sm:$0xff] %v315
                $region60: #{global_atten_forward.1} parent=54 // loop_footer
                  %s250 = sadd.s32 1, %s246
                $region61: #{global_atten_forward.1} parent=54 // loop_footer_branch
                  %245 = sbr.rel target = $region57
                $region62: #{global_atten_forward.1} parent=54 // loop_exit
                  _
              $region55: #{global_atten_forward.1} parent=39 // pred_fallthru
                _
              // Predicated region
              $region63: #{global_atten_forward.1} parent=39 // pred_check
                _
              $region64: #{global_atten_forward.1} parent=39 // pred_check_branch
                %318 = sbr.rel target = $region66
              $region65: #{global_atten_forward.1} parent=39 // pred_region
                _
              $region66: #{global_atten_forward.1} parent=39 // pred_fallthru
                _
            $region40: #{global_atten_forward.1} parent=35 // pred_fallthru
              _
            // Predicated region
            $region41: #{global_atten_forward.1} parent=35 // pred_check
              _
            $region42: #{global_atten_forward.1} parent=35 // pred_check_branch
              %169 = sbr.rel target = $region44
            $region43: #{global_atten_forward.1} parent=35 // pred_region
              loop: start=0, step=1, limit=1
              $region45: #{global_atten_forward.1} parent=43 // loop_pre_header
                _
              $region46: #{global_atten_forward.1} parent=43 // loop_header
                %s172 = sphi 0, %s176
                %p173 = scmp.ge.s32.totalorder %s172, 1
                %s177 = sphi %s163, %s163
                %s178 = sphi %s160, %s160
              $region47: #{global_atten_forward.1} parent=43 // loop_header_branch
                %175 = sbr.rel (%p173) target = $region51
              $region48: #{global_atten_forward.1} parent=43 // loop_body
                %v179 = vld [vmem:[%s177] sm:$0xff]
                %180 = vst [vmem:[%s178] sm:$0xff] %v179
                %v181 = vld [vmem:[%s177 + $0x10] sm:$0xff]
                %182 = vst [vmem:[%s178 + $0x8] sm:$0xff] %v181
                %v183 = vld [vmem:[%s177 + $0x20] sm:$0xff]
                %184 = vst [vmem:[%s178 + $0x10] sm:$0xff] %v183
                %v185 = vld [vmem:[%s177 + $0x30] sm:$0xff]
                %186 = vst [vmem:[%s178 + $0x18] sm:$0xff] %v185
                %v187 = vld [vmem:[%s177 + $0x40] sm:$0xff]
                %188 = vst [vmem:[%s178 + $0x20] sm:$0xff] %v187
                %v189 = vld [vmem:[%s177 + $0x50] sm:$0xff]
                %190 = vst [vmem:[%s178 + $0x28] sm:$0xff] %v189
                %v191 = vld [vmem:[%s177 + $0x60] sm:$0xff]
                %192 = vst [vmem:[%s178 + $0x30] sm:$0xff] %v191
                %v193 = vld [vmem:[%s177 + $0x70] sm:$0xff]
                %194 = vst [vmem:[%s178 + $0x38] sm:$0xff] %v193
                %v195 = vld [vmem:[%s177 + $0x80] sm:$0xff]
                %196 = vst [vmem:[%s178 + $0x40] sm:$0xff] %v195
                %v197 = vld [vmem:[%s177 + $0x90] sm:$0xff]
                %198 = vst [vmem:[%s178 + $0x48] sm:$0xff] %v197
                %v199 = vld [vmem:[%s177 + $0xa0] sm:$0xff]
                %200 = vst [vmem:[%s178 + $0x50] sm:$0xff] %v199
                %v201 = vld [vmem:[%s177 + $0xb0] sm:$0xff]
                %202 = vst [vmem:[%s178 + $0x58] sm:$0xff] %v201
                %v203 = vld [vmem:[%s177 + $0xc0] sm:$0xff]
                %204 = vst [vmem:[%s178 + $0x60] sm:$0xff] %v203
                %v205 = vld [vmem:[%s177 + $0xd0] sm:$0xff]
                %206 = vst [vmem:[%s178 + $0x68] sm:$0xff] %v205
                %v207 = vld [vmem:[%s177 + $0xe0] sm:$0xff]
                %208 = vst [vmem:[%s178 + $0x70] sm:$0xff] %v207
                %v209 = vld [vmem:[%s177 + $0xf0] sm:$0xff]
                %210 = vst [vmem:[%s178 + $0x78] sm:$0xff] %v209
                %v211 = vld [vmem:[%s177 + $0x100] sm:$0xff]
                %212 = vst [vmem:[%s178 + $0x80] sm:$0xff] %v211
                %v213 = vld [vmem:[%s177 + $0x110] sm:$0xff]
                %214 = vst [vmem:[%s178 + $0x88] sm:$0xff] %v213
                %v215 = vld [vmem:[%s177 + $0x120] sm:$0xff]
                %216 = vst [vmem:[%s178 + $0x90] sm:$0xff] %v215
                %v217 = vld [vmem:[%s177 + $0x130] sm:$0xff]
                %218 = vst [vmem:[%s178 + $0x98] sm:$0xff] %v217
                %v219 = vld [vmem:[%s177 + $0x140] sm:$0xff]
                %220 = vst [vmem:[%s178 + $0xa0] sm:$0xff] %v219
                %v221 = vld [vmem:[%s177 + $0x150] sm:$0xff]
                %222 = vst [vmem:[%s178 + $0xa8] sm:$0xff] %v221
                %v223 = vld [vmem:[%s177 + $0x160] sm:$0xff]
                %224 = vst [vmem:[%s178 + $0xb0] sm:$0xff] %v223
                %v225 = vld [vmem:[%s177 + $0x170] sm:$0xff]
                %226 = vst [vmem:[%s178 + $0xb8] sm:$0xff] %v225
                %v227 = vld [vmem:[%s177 + $0x180] sm:$0xff]
                %228 = vst [vmem:[%s178 + $0xc0] sm:$0xff] %v227
                %v229 = vld [vmem:[%s177 + $0x190] sm:$0xff]
                %230 = vst [vmem:[%s178 + $0xc8] sm:$0xff] %v229
                %v231 = vld [vmem:[%s177 + $0x1a0] sm:$0xff]
                %232 = vst [vmem:[%s178 + $0xd0] sm:$0xff] %v231
                %v233 = vld [vmem:[%s177 + $0x1b0] sm:$0xff]
                %234 = vst [vmem:[%s178 + $0xd8] sm:$0xff] %v233
                %v235 = vld [vmem:[%s177 + $0x1c0] sm:$0xff]
                %236 = vst [vmem:[%s178 + $0xe0] sm:$0xff] %v235
                %v237 = vld [vmem:[%s177 + $0x1d0] sm:$0xff]
                %238 = vst [vmem:[%s178 + $0xe8] sm:$0xff] %v237
                %v239 = vld [vmem:[%s177 + $0x1e0] sm:$0xff]
                %240 = vst [vmem:[%s178 + $0xf0] sm:$0xff] %v239
                %v241 = vld [vmem:[%s177 + $0x1f0] sm:$0xff]
                %242 = vst [vmem:[%s178 + $0xf8] sm:$0xff] %v241
              $region49: #{global_atten_forward.1} parent=43 // loop_footer
                %s176 = sadd.s32 1, %s172
              $region50: #{global_atten_forward.1} parent=43 // loop_footer_branch
                %171 = sbr.rel target = $region46
              $region51: #{global_atten_forward.1} parent=43 // loop_exit
                _
            $region44: #{global_atten_forward.1} parent=35 // pred_fallthru
              _
          $region36: #{global_atten_forward.1} parent=31 // pred_fallthru
            _
          %319 = vnop
        $region32: #{global_atten_forward.1} parent=27 // pred_fallthru
          _
      $region28: #{global_atten_forward.1} parent=5 // pred_fallthru
        _
      %p320 = scmp.le.s32.totalorder 1, %s11
      %p321 = scmp.lt.s32.totalorder %s11, 3
      %p322 = pnand %p320, %p321
      %p323 = pneg %p322
      // Predicated region
      $region67: #{global_atten_forward.1} parent=5 // pred_check
        _
      $region68: #{global_atten_forward.1} parent=5 // pred_check_branch
        %325 = sbr.rel (%p322) target = $region70
      $region69: #{global_atten_forward.1} parent=5 // pred_region
        %s326 = ssub.s32 %s11, 1
        %s327 = sand.u32 %s24, 1
        %s328 = sand.u32 %s24, 1
        %s329 = smul.addr %s328, 256
        %s330 = scalar_lea.vmem [#allocation3], %s329
        // Predicated region
        $region71: #{global_atten_forward.1} parent=69 // pred_check
          %p331 = pneg %p37
        $region72: #{global_atten_forward.1} parent=69 // pred_check_branch
          %333 = sbr.rel (%p331) target = $region74
        $region73: #{global_atten_forward.1} parent=69 // pred_region
          _
        $region74: #{global_atten_forward.1} parent=69 // pred_fallthru
          _
        %s334 = sand.u32 %s24, 1
        %s335 = sand.u32 %s24, 1
        %s336 = smul.addr %s335, 256
        %s337 = scalar_lea.vmem [#allocation3], %s336
        %p338 = pneg %p37
        %p339 = pneg %p34
        %p340 = pneg %p58
        %p341 = pneg %p55
        %p342 = pneg %p79
        %p343 = pneg %p76
        %p344 = pneg %p100
        %p345 = pneg %p97
        %p346 = pneg %p126
        %p347 = pneg %p123
        %s348 = smul.u32 2, %s16
        %p349 = scmp.lt.s32.totalorder %s348, 3
        %s350 = scalar_select %p349, %s348, 3
        %s351 = scalar_lea.vmem %s4, %s350
        %s352 = smul.u32 2, %s16
        %s353 = smul.u32 2, %s16
        %p354 = scmp.lt.s32.totalorder %s353, 3
        %s355 = scalar_select %p354, %s353, 3
        %s356 = scalar_lea.vmem %s4, %s355
        %s357 = smul.u32 2, %s16
        %v358 = vld [vmem:[%s1] sm:$0xff]
        %v359 = vld [vmem:[%s330] sm:$0xff]
        %v360 = vld [vmem:[%s330 + $0x8] sm:$0xff]
        %v361 = vld [vmem:[%s330 + $0x10] sm:$0xff]
        %v362 = vld [vmem:[%s330 + $0x18] sm:$0xff]
        %v363 = vld [vmem:[%s330 + $0x20] sm:$0xff]
        %v364 = vld [vmem:[%s330 + $0x28] sm:$0xff]
        %v365 = vld [vmem:[%s330 + $0x30] sm:$0xff]
        %v366 = vld [vmem:[%s330 + $0x38] sm:$0xff]
        %v367 = vld [vmem:[%s330 + $0x40] sm:$0xff]
        %v368 = vld [vmem:[%s330 + $0x48] sm:$0xff]
        %v369 = vld [vmem:[%s330 + $0x50] sm:$0xff]
        %v370 = vld [vmem:[%s330 + $0x58] sm:$0xff]
        %v371 = vld [vmem:[%s330 + $0x60] sm:$0xff]
        %v372 = vld [vmem:[%s330 + $0x68] sm:$0xff]
        %v373 = vld [vmem:[%s330 + $0x70] sm:$0xff]
        %v374 = vld [vmem:[%s330 + $0x78] sm:$0xff]
        %v375 = vld [vmem:[%s330 + $0x80] sm:$0xff]
        %v376 = vld [vmem:[%s330 + $0x88] sm:$0xff]
        %v377 = vld [vmem:[%s330 + $0x90] sm:$0xff]
        %v378 = vld [vmem:[%s330 + $0x98] sm:$0xff]
        %v379 = vld [vmem:[%s330 + $0xa0] sm:$0xff]
        %v380 = vld [vmem:[%s330 + $0xa8] sm:$0xff]
        %v381 = vld [vmem:[%s330 + $0xb0] sm:$0xff]
        %v382 = vld [vmem:[%s330 + $0xb8] sm:$0xff]
        %v383 = vld [vmem:[%s330 + $0xc0] sm:$0xff]
        %v384 = vld [vmem:[%s330 + $0xc8] sm:$0xff]
        %v385 = vld [vmem:[%s330 + $0xd0] sm:$0xff]
        %v386 = vld [vmem:[%s330 + $0xd8] sm:$0xff]
        %v387 = vld [vmem:[%s330 + $0xe0] sm:$0xff]
        %v388 = vld [vmem:[%s330 + $0xe8] sm:$0xff]
        %v389 = vld [vmem:[%s330 + $0xf0] sm:$0xff]
        %v390 = vld [vmem:[%s330 + $0xf8] sm:$0xff]
        %v392 = vunpack.c.l.b16 %v358
        %v393 = vunpack.c.h.b16 %v358
        %v394 = vpack.c.b16 %v392, %v392
        %v395 = vpack.c.b16 %v393, %v393
        %v430 = vunpack.c.l.b16 %v359
        %v431 = vunpack.c.h.b16 %v359
        %v432 = vunpack.c.l.b16 %v360
        %v433 = vunpack.c.h.b16 %v360
        %v434 = vunpack.c.l.b16 %v361
        %v435 = vunpack.c.h.b16 %v361
        %v436 = vunpack.c.l.b16 %v362
        %v437 = vunpack.c.h.b16 %v362
        %v438 = vunpack.c.l.b16 %v363
        %v439 = vunpack.c.h.b16 %v363
        %v440 = vunpack.c.l.b16 %v364
        %v441 = vunpack.c.h.b16 %v364
        %v442 = vunpack.c.l.b16 %v365
        %v443 = vunpack.c.h.b16 %v365
        %v444 = vunpack.c.l.b16 %v366
        %v445 = vunpack.c.h.b16 %v366
        %v446 = vunpack.c.l.b16 %v367
        %v447 = vunpack.c.h.b16 %v367
        %v448 = vunpack.c.l.b16 %v368
        %v449 = vunpack.c.h.b16 %v368
        %v450 = vunpack.c.l.b16 %v369
        %v451 = vunpack.c.h.b16 %v369
        %v452 = vunpack.c.l.b16 %v370
        %v453 = vunpack.c.h.b16 %v370
        %v454 = vunpack.c.l.b16 %v371
        %v455 = vunpack.c.h.b16 %v371
        %v456 = vunpack.c.l.b16 %v372
        %v457 = vunpack.c.h.b16 %v372
        %v458 = vunpack.c.l.b16 %v373
        %v459 = vunpack.c.h.b16 %v373
        %v460 = vunpack.c.l.b16 %v374
        %v461 = vunpack.c.h.b16 %v374
        %v462 = vunpack.c.l.b16 %v375
        %v463 = vunpack.c.h.b16 %v375
        %v464 = vunpack.c.l.b16 %v376
        %v465 = vunpack.c.h.b16 %v376
        %v466 = vunpack.c.l.b16 %v377
        %v467 = vunpack.c.h.b16 %v377
        %v468 = vunpack.c.l.b16 %v378
        %v469 = vunpack.c.h.b16 %v378
        %v470 = vunpack.c.l.b16 %v379
        %v471 = vunpack.c.h.b16 %v379
        %v472 = vunpack.c.l.b16 %v380
        %v473 = vunpack.c.h.b16 %v380
        %v474 = vunpack.c.l.b16 %v381
        %v475 = vunpack.c.h.b16 %v381
        %v476 = vunpack.c.l.b16 %v382
        %v477 = vunpack.c.h.b16 %v382
        %v478 = vunpack.c.l.b16 %v383
        %v479 = vunpack.c.h.b16 %v383
        %v480 = vunpack.c.l.b16 %v384
        %v481 = vunpack.c.h.b16 %v384
        %v482 = vunpack.c.l.b16 %v385
        %v483 = vunpack.c.h.b16 %v385
        %v484 = vunpack.c.l.b16 %v386
        %v485 = vunpack.c.h.b16 %v386
        %v486 = vunpack.c.l.b16 %v387
        %v487 = vunpack.c.h.b16 %v387
        %v488 = vunpack.c.l.b16 %v388
        %v489 = vunpack.c.h.b16 %v388
        %v490 = vunpack.c.l.b16 %v389
        %v491 = vunpack.c.h.b16 %v389
        %v492 = vunpack.c.l.b16 %v390
        %v493 = vunpack.c.h.b16 %v390
        %v494 = vpack.c.b16 %v432, %v430
        %v495 = vpack.c.b16 %v433, %v431
        %v496 = vpack.c.b16 %v436, %v434
        %v497 = vpack.c.b16 %v437, %v435
        %v498 = vpack.c.b16 %v440, %v438
        %v499 = vpack.c.b16 %v441, %v439
        %v500 = vpack.c.b16 %v444, %v442
        %v501 = vpack.c.b16 %v445, %v443
        %v502 = vpack.c.b16 %v448, %v446
        %v503 = vpack.c.b16 %v449, %v447
        %v504 = vpack.c.b16 %v452, %v450
        %v505 = vpack.c.b16 %v453, %v451
        %v506 = vpack.c.b16 %v456, %v454
        %v507 = vpack.c.b16 %v457, %v455
        %v508 = vpack.c.b16 %v460, %v458
        %v509 = vpack.c.b16 %v461, %v459
        %v510 = vpack.c.b16 %v464, %v462
        %v511 = vpack.c.b16 %v465, %v463
        %v512 = vpack.c.b16 %v468, %v466
        %v513 = vpack.c.b16 %v469, %v467
        %v514 = vpack.c.b16 %v472, %v470
        %v515 = vpack.c.b16 %v473, %v471
        %v516 = vpack.c.b16 %v476, %v474
        %v517 = vpack.c.b16 %v477, %v475
        %v518 = vpack.c.b16 %v480, %v478
        %v519 = vpack.c.b16 %v481, %v479
        %v520 = vpack.c.b16 %v484, %v482
        %v521 = vpack.c.b16 %v485, %v483
        %v522 = vpack.c.b16 %v488, %v486
        %v523 = vpack.c.b16 %v489, %v487
        %v524 = vpack.c.b16 %v492, %v490
        %v525 = vpack.c.b16 %v493, %v491
        %558 = vmatprep.subr.bf16.mxu0 %v495
        %559 = vmatpush1.bf16.msra.mxu0 %v494
        %560 = vmatprep.subr.bf16.mxu0 %v497
        %561 = vmatpush1.bf16.msra.mxu0 %v496
        %562 = vmatprep.subr.bf16.mxu0 %v499
        %563 = vmatpush1.bf16.msra.mxu0 %v498
        %564 = vmatprep.subr.bf16.mxu0 %v501
        %565 = vmatpush1.bf16.msra.mxu0 %v500
        %566 = vmatprep.subr.bf16.mxu0 %v503
        %567 = vmatpush1.bf16.msra.mxu0 %v502
        %568 = vmatprep.subr.bf16.mxu0 %v505
        %569 = vmatpush1.bf16.msra.mxu0 %v504
        %570 = vmatprep.subr.bf16.mxu0 %v507
        %571 = vmatpush1.bf16.msra.mxu0 %v506
        %572 = vmatprep.subr.bf16.mxu0 %v509
        %573 = vmatpush1.bf16.msra.mxu0 %v508
        %574 = vmatprep.subr.bf16.mxu0 %v511
        %575 = vmatpush1.bf16.msra.mxu0 %v510
        %576 = vmatprep.subr.bf16.mxu0 %v513
        %577 = vmatpush1.bf16.msra.mxu0 %v512
        %578 = vmatprep.subr.bf16.mxu0 %v515
        %579 = vmatpush1.bf16.msra.mxu0 %v514
        %580 = vmatprep.subr.bf16.mxu0 %v517
        %581 = vmatpush1.bf16.msra.mxu0 %v516
        %582 = vmatprep.subr.bf16.mxu0 %v519
        %583 = vmatpush1.bf16.msra.mxu0 %v518
        %584 = vmatprep.subr.bf16.mxu0 %v521
        %585 = vmatpush1.bf16.msra.mxu0 %v520
        %586 = vmatprep.subr.bf16.mxu0 %v523
        %587 = vmatpush1.bf16.msra.mxu0 %v522
        %588 = vmatprep.subr.bf16.mxu0 %v525
        %589 = vmatpush1.bf16.msra.mxu0 %v524
        %590 = vmatprep.mubr.bf16.mxu0 %v395
        %591 = vmatmul.mubr.bf16.gmra.mrb[0].mxu0 %v394
        %v592 = vpop.f32.mrb[0].mxu0
        %v593 = vadd.f32 0.0, %v592
        %v594 = vpop.f32.mrb[0].mxu0
        %v595 = vadd.f32 0.0, %v594
        %v596 = vpop.f32.mrb[0].mxu0
        %v597 = vpop.f32.mrb[0].mxu0
        %598 = vdwg.mxu0
        %v599 = vmax.f32 %v593, 0.0
        %v600 = vmax.f32 %v595, 0.0
        %v601 = vld [vmem:[%s2] sm:$0xff]
        %603 = vset.pattern.permute.xlu0 0
        %604 = vperm.xlu0 %603, %v601
        %v605 = vpop.permute.xlu0 %604
        %v607 = vmul.f32 %v599, %v605
        %v608 = vmul.f32 %v600, %v605
        %v609 = vrot.slane %v607, 4
        %v610 = vadd.f32 %v607, %v609
        %v611 = vrot.slane %v610, 2
        %v612 = vadd.f32 %v610, %v611
        %v613 = vrot.slane %v612, 1
        %v614 = vadd.f32 %v612, %v613
        %v615 = vrot.slane %v608, 4
        %v616 = vadd.f32 %v608, %v615
        %v617 = vrot.slane %v616, 2
        %v618 = vadd.f32 %v616, %v617
        %v619 = vrot.slane %v618, 1
        %v620 = vadd.f32 %v618, %v619
        %s621 = sld [smem:[#allocation2]]
        %v622 = vstv %s621
        %v623 = vadd.f32 %v614, %v622
        %v624 = vadd.f32 %v620, %v622
        %v627 = vcombine.low %v623, %v624
        %v629 = vunpack.c.l.s4 1966171168
        %v630 = vunpack.c.0.s8 %v629
        %v631 = vlaneseq
        %v632 = vshrl.u32 %v631, 7
        %v633 = vsub.s32 %v630, %v632
        %v634 = vrot.slane %v627, %v633
        %v636 = vunpack.c.l.s4 1966171168
        %v637 = vunpack.c.0.s8 %v636
        %v638 = vlaneseq
        %v639 = vshrl.u32 %v638, 7
        %v640 = vsub.s32 %v637, %v639
        %v641 = vrot.slane %v634, %v640
        %v643 = vlaneseq
        %vm644 = vcmp.ge.s32.totalorder %v643, 0
        %vm645 = vcmp.lt.s32.totalorder %v643, 256
        %vm646 = vmand %vm644, %vm645
        %647 = vst.msk [vmem:[%s356] sm:$0x3] %vm646, %v641
        %s648 = smul.u32 2, %s16
        %p649 = scmp.lt.s32.totalorder %s648, 3
        %s650 = scalar_select %p649, %s648, 3
        %s651 = scalar_lea.vmem %s4, %s650
        // Predicated region
        $region75: #{global_atten_forward.1} parent=69 // pred_check
          %p652 = pneg %p123
        $region76: #{global_atten_forward.1} parent=69 // pred_check_branch
          %654 = sbr.rel (%p652) target = $region78
        $region77: #{global_atten_forward.1} parent=69 // pred_region
          %s655 = smul.u32 2, %s16
        $region78: #{global_atten_forward.1} parent=69 // pred_fallthru
          _
      $region70: #{global_atten_forward.1} parent=5 // pred_fallthru
        _
      %p656 = scmp.le.s32.totalorder 2, %s11
      // Predicated region
      $region79: #{global_atten_forward.1} parent=5 // pred_check
        %p657 = pneg %p656
      $region80: #{global_atten_forward.1} parent=5 // pred_check_branch
        %659 = sbr.rel (%p657) target = $region82
      $region81: #{global_atten_forward.1} parent=5 // pred_region
        %s660 = ssub.s32 %s11, 2
        // Predicated region
        $region83: #{global_atten_forward.1} parent=81 // pred_check
          %p661 = pneg %p129
        $region84: #{global_atten_forward.1} parent=81 // pred_check_branch
          %663 = sbr.rel (%p661) target = $region86
        $region85: #{global_atten_forward.1} parent=81 // pred_region
          %s664 = smul.u32 2, %s17
          %p665 = scmp.lt.s32.totalorder %s664, 3
          %s666 = scalar_select %p665, %s664, 3
          %s667 = scalar_lea.vmem %s4, %s666
        $region86: #{global_atten_forward.1} parent=81 // pred_fallthru
          _
      $region82: #{global_atten_forward.1} parent=5 // pred_fallthru
        _
    $region6: #{global_atten_forward.1} parent=1 // loop_footer
      %s15 = sadd.s32 1, %s11
    $region7: #{global_atten_forward.1} parent=1 // loop_footer_branch
      %10 = sbr.rel target = $region3
    $region8: #{global_atten_forward.1} parent=1 // loop_exit
      _

</llo_original>
